<compile_context>
chip_gen: v7x
topology: tpu7x:2x2x1
jax: 0.10.0
libtpu: 0.0.40
codegen_flags: <defaults>
</compile_context>

<pallas_src>
import functools

import jax
import jax.numpy as jnp
from jax.experimental import pallas as pl
from jax.experimental.pallas import tpu as pltpu


# ----------------------------- Pallas kernel ------------------------------ #

def _silu(x):
    return x * jax.nn.sigmoid(x)


def _layernorm_padded(h, gamma, beta, n_true, eps=1e-5):
    # h is (rows, Hpad) with exact zeros in all padded lanes.  Centered
    # two-pass variance: mu from the plain row sum (padded lanes contribute 0),
    # then the squared-deviation sum with padded lanes masked out (they hold
    # -mu after centering).  gamma/beta are zero in padded lanes -> output
    # padded lanes stay exactly zero.
    h_pad = h.shape[-1]
    inv_n = 1.0 / float(n_true)
    mu = jnp.sum(h, axis=-1, keepdims=True) * inv_n
    cen = h - mu
    if n_true != h_pad:
        lane = jax.lax.broadcasted_iota(jnp.int32, h.shape, dimension=h.ndim - 1)
        cen_sq = jnp.where(lane < n_true, cen, 0.0)
    else:
        cen_sq = cen
    var = jnp.sum(cen_sq * cen_sq, axis=-1, keepdims=True) * inv_n
    return cen * jax.lax.rsqrt(var + eps) * gamma + beta
    # TODO(synk): if bundle dumps show the XLU as the binding slot, fold a
    # row-sum-of-W column into W1/W2 so mu arrives from the MXU for free.


def _mlp_kernel(x_ref, w1_ref, w2_ref, w3_ref, vec_ref, b3_ref, o_ref, *,
                hidden_true):
    """One (TM, Din_pad) row tile through trunk + head; weights VMEM-resident."""
    b1, g1, be1 = vec_ref[0:1, :], vec_ref[1:2, :], vec_ref[2:3, :]
    b2, g2, be2 = vec_ref[3:4, :], vec_ref[4:5, :], vec_ref[5:6, :]
    w1, w2, w3 = w1_ref[...], w2_ref[...], w3_ref[...]
    b3 = b3_ref[...]

    tm = x_ref.shape[0]
    half = tm // 2            # tm is a multiple of 32 -> half is 16-aligned
    # Two independent row sub-chunks in one basic block: the scheduler can
    # co-issue chunk-B MXU work with chunk-A LayerNorm/SiLU (VPU/EUP/XLU),
    # filling slots the straight-line version left idle.
    for c in range(2):
        r0, r1 = c * half, (c + 1) * half
        h = jnp.dot(x_ref[r0:r1, :], w1,
                    preferred_element_type=jnp.float32) + b1
        h = _silu(_layernorm_padded(h, g1, be1, hidden_true))
        h = jnp.dot(h.astype(jnp.bfloat16), w2,
                    preferred_element_type=jnp.float32) + b2
        h = _silu(_layernorm_padded(h, g2, be2, hidden_true))
        y = jnp.dot(h.astype(jnp.bfloat16), w3,
                    preferred_element_type=jnp.float32) + b3
        o_ref[r0:r1, :] = y.astype(o_ref.dtype)


# ----------------------------- kernel wrapper ------------------------------ #

_TM_ALIGN = 32   # keeps the in-kernel 2-way split 16-row aligned (bf16 vregs)


def _round_up(x, m):
    return (x + m - 1) // m * m


def _choose_tile(n, tm_max):
    """Pick (tm, n_padded): minimal padding, >=2 even grid steps for megacore."""
    steps = max(1, pl.cdiv(n, tm_max))
    if n >= 2 * _TM_ALIGN:
        steps = max(steps, 2)      # let ("parallel",) shard across 2 TCs (v7x)
        steps += steps % 2         # even step count balances the two cores
    tm = _round_up(pl.cdiv(n, steps), _TM_ALIGN)
    return tm, tm * steps


def pack_kernel_params(p):
    """Pad/cast raw f32 params into the lane-dense kernel operand layout (once)."""
    din, hidden = p["w1"].shape
    dout = p["w3"].shape[1]
    din_p, h_p, dout_p = (_round_up(d, 128) for d in (din, hidden, dout))

    def pad2(a, r, c):
        return jnp.pad(a, ((0, r - a.shape[0]), (0, c - a.shape[1])))

    vec = jnp.zeros((8, h_p), jnp.float32)
    for row, name in enumerate(("b1", "g1", "beta1", "b2", "g2", "beta2")):
        vec = vec.at[row, :hidden].set(p[name][0])

    # TODO(synk): on v7x, optionally fp8-quantize w1/w2/w3 (scales folded into
    # b/gamma) behind an accuracy gate for ~2x MXU throughput; kept bf16 here.
    return dict(
        w1=pad2(p["w1"], din_p, h_p).astype(jnp.bfloat16),
        w2=pad2(p["w2"], h_p, h_p).astype(jnp.bfloat16),
        w3=pad2(p["w3"], h_p, dout_p).astype(jnp.bfloat16),
        vec=vec,                               # rows: b1,g1,beta1,b2,g2,beta2,0,0
        b3=pad2(p["b3"], 1, dout_p).astype(jnp.float32),
        hidden=hidden, dout=dout,              # python ints (static metadata)
    )


def critic_network_mlp(x, kp, *, tm_max=512, out_dtype=jnp.float32):
    """x: (N, Din) f32 -> (N, actor_dim*bins) via the fused Pallas MLP kernel.

    Set out_dtype=jnp.bfloat16 to halve output HBM writeback (precision is
    already bounded by the bf16 matmul operands).
    """
    n, din = x.shape
    din_p, h_p = kp["w1"].shape
    dout_p = kp["w3"].shape[1]
    hidden, dout = kp["hidden"], kp["dout"]

    # TODO(synk): for very small N (< ~128 rows) the ~0.35us/step grid overhead
    # dominates and a plain XLA-fused MLP is faster; Pallas path kept here.
    tm, n_p = _choose_tile(n, tm_max)
    steps = n_p // tm

    # bf16 BEFORE padding: no padded f32 intermediate in the XLA glue.
    x_p = jnp.pad(x.astype(jnp.bfloat16), ((0, n_p - n), (0, din_p - din)))

    out_bytes = 2 if out_dtype == jnp.bfloat16 else 4
    weight_bytes = ((din_p * h_p + h_p * h_p + h_p * dout_p) * 2   # bf16, 1-buffered
                    + 8 * h_p * 4 + dout_p * 4)                    # vec + b3 (f32)
    vmem_bytes = (2 * tm * din_p * 2            # double-buffered streamed x tiles
                  + 2 * tm * dout_p * out_bytes  # double-buffered out tiles
                  + weight_bytes
                  + 4 * (tm // 2) * h_p * 4)     # live f32 intermediates per chunk
    vmem_limit = int(min(max(vmem_bytes * 1.25 + (2 << 20), 8 << 20), 100 << 20))

    flops = 2 * n_p * (din_p * h_p + h_p * h_p + h_p * dout_p)
    bytes_accessed = n_p * din_p * 2 + n_p * dout_p * out_bytes + weight_bytes
    transcendentals = 2 * n_p * h_p             # two SiLU sigmoids per row

    def _resident(shape):
        # constant index map + single buffer: DMA'd once, stays VMEM-resident.
        return pl.BlockSpec(shape, lambda i: (0, 0),
                            pipeline_mode=pl.Buffered(1))

    y = pl.pallas_call(
        functools.partial(_mlp_kernel, hidden_true=hidden),
        out_shape=jax.ShapeDtypeStruct((n_p, dout_p), out_dtype),
        grid=(steps,),
        in_specs=[
            pl.BlockSpec((tm, din_p), lambda i: (i, 0)),   # streamed rows
            _resident((din_p, h_p)),                       # W1
            _resident((h_p, h_p)),                         # W2
            _resident((h_p, dout_p)),                      # W3
            _resident((8, h_p)),                           # packed b/gamma/beta
            _resident((1, dout_p)),                        # head bias
        ],
        out_specs=pl.BlockSpec((tm, dout_p), lambda i: (i, 0)),
        compiler_params=pltpu.CompilerParams(
            dimension_semantics=("parallel",),
            vmem_limit_bytes=vmem_limit),
        cost_estimate=pl.CostEstimate(flops=flops,
                                      transcendentals=transcendentals,
                                      bytes_accessed=bytes_accessed),
    )(x_p, kp["w1"], kp["w2"], kp["w3"], kp["vec"], kp["b3"])
    return y[:n, :dout]


# ------------------------------ JAX glue ---------------------------------- #
# TODO(synk): encode_action / zoom_in were imported from utils in the source;
# reproduced here with the standard CQN semantics (uniform bin split + zoom).

def zoom_in(low, high, idx, bins):
    slice_range = (high - low) / bins
    new_low = low + slice_range * idx
    new_high = low + slice_range * (idx + 1.0)
    return new_low, new_high


def encode_action(cont_action, init_low, init_high, levels, bins):
    b, a = cont_action.shape
    low = jnp.broadcast_to(init_low, (b, a))
    high = jnp.broadcast_to(init_high, (b, a))
    idxs = []
    for _ in range(levels):
        slice_range = (high - low) / bins
        idx = jnp.floor((cont_action - low) / slice_range)
        idx = jnp.clip(idx, 0.0, bins - 1.0)
        idxs.append(idx)
        low, high = zoom_in(low, high, idx, bins)
    return jnp.stack(idxs, axis=-2)  # (B, levels, actor_dim), float bin index


def c2f_critic_forward(params, kparams, obs, continuous_action, *, levels, bins):
    b = obs.shape[0]
    a = params["initial_low"].shape[0]
    init_low, init_high = params["initial_low"], params["initial_high"]

    discrete = encode_action(continuous_action, init_low, init_high, levels, bins)

    low = jnp.broadcast_to(init_low, (b, a))
    high = jnp.broadcast_to(init_high, (b, a))
    prev_actions = []
    for level in range(levels):
        prev_actions.append((low + high) / 2.0)
        low, high = zoom_in(low, high, discrete[:, level, :], bins)
    prev = jnp.stack(prev_actions, axis=1)                        # (B, L, A)

    level_id = jnp.broadcast_to(jnp.eye(levels, dtype=obs.dtype)[None],
                                (b, levels, levels))              # (B, L, L)
    obs_rep = jnp.broadcast_to(obs[:, None, :], (b, levels, obs.shape[-1]))
    x = jnp.concatenate([obs_rep, prev, level_id], axis=-1)       # (B, L, Din)

    y = critic_network_mlp(x.reshape(b * levels, -1), kparams)    # Pallas hot path
    qs = y.reshape(b, levels, a, bins)                            # (B, L, A, bins)

    idx_i = discrete.astype(jnp.int32)                            # (B, L, A)
    qs_a = jnp.take_along_axis(qs, idx_i[..., None], axis=-1)[..., 0]
    return qs, qs_a


# ----------------------------- parameter init ------------------------------ #

def init_params(key, low_dim, actor_dim, hidden_dim, levels, bins):
    din = low_dim + actor_dim + levels
    dout = actor_dim * bins
    ks = jax.random.split(key, 4)
    s = 0.1
    return dict(
        w1=jax.random.normal(ks[0], (din, hidden_dim), jnp.float32) * s,
        b1=jnp.zeros((1, hidden_dim), jnp.float32),
        g1=jnp.ones((1, hidden_dim), jnp.float32),
        beta1=jnp.zeros((1, hidden_dim), jnp.float32),
        w2=jax.random.normal(ks[1], (hidden_dim, hidden_dim), jnp.float32) * s,
        b2=jnp.zeros((1, hidden_dim), jnp.float32),
        g2=jnp.ones((1, hidden_dim), jnp.float32),
        beta2=jnp.zeros((1, hidden_dim), jnp.float32),
        # torch __init__ zero-fills the head; use small deterministic random
        # values instead so the kernel output is nontrivial for the check.
        w3=jax.random.normal(ks[2], (hidden_dim, dout), jnp.float32) * s,
        b3=jax.random.normal(ks[3], (1, dout), jnp.float32) * s,
        initial_low=jnp.full((actor_dim,), -1.0, jnp.float32),
        initial_high=jnp.full((actor_dim,), 1.0, jnp.float32),
    )


# ------------------------------ reference ---------------------------------- #

def _layernorm_ref(h, gamma, beta, eps=1e-5):
    mu = jnp.mean(h, axis=-1, keepdims=True)
    var = jnp.mean((h - mu) ** 2, axis=-1, keepdims=True)
    return (h - mu) * jax.lax.rsqrt(var + eps) * gamma + beta


def mlp_reference(x, p):
    bf = jnp.bfloat16
    h = jnp.dot(x.astype(bf), p["w1"].astype(bf),
                preferred_element_type=jnp.float32) + p["b1"]
    h = _silu(_layernorm_ref(h, p["g1"], p["beta1"]))
    h = jnp.dot(h.astype(bf), p["w2"].astype(bf),
                preferred_element_type=jnp.float32) + p["b2"]
    h = _silu(_layernorm_ref(h, p["g2"], p["beta2"]))
    return jnp.dot(h.astype(bf), p["w3"].astype(bf),
                   preferred_element_type=jnp.float32) + p["b3"]


# --------------------------------- main ------------------------------------ #

if __name__ == "__main__":
    B, low_dim, actor_dim, hidden_dim, levels, bins = 2, 10, 4, 32, 3, 5

    key = jax.random.PRNGKey(0)
    kp_key, ko, ka = jax.random.split(key, 3)
    params = init_params(kp_key, low_dim, actor_dim, hidden_dim, levels, bins)
    kparams = pack_kernel_params(params)

    obs = jax.random.normal(ko, (B, low_dim), jnp.float32)
    continuous_action = jax.random.uniform(ka, (B, actor_dim), jnp.float32,
                                           minval=-1.0, maxval=1.0)

    qs, qs_a = c2f_critic_forward(params, kparams, obs, continuous_action,
                                  levels=levels, bins=bins)
    qs = jax.block_until_ready(qs)
    qs_a = jax.block_until_ready(qs_a)

    assert qs.shape == (B, levels, actor_dim, bins), qs.shape
    assert qs_a.shape == (B, levels, actor_dim), qs_a.shape

    # Cross-check the Pallas MLP against a pure-JAX reference on the same slab.
    discrete = encode_action(continuous_action, params["initial_low"],
                             params["initial_high"], levels, bins)
    low = jnp.broadcast_to(params["initial_low"], (B, actor_dim))
    high = jnp.broadcast_to(params["initial_high"], (B, actor_dim))
    prev = []
    for lvl in range(levels):
        prev.append((low + high) / 2.0)
        low, high = zoom_in(low, high, discrete[:, lvl, :], bins)
    level_id = jnp.broadcast_to(jnp.eye(levels, dtype=obs.dtype)[None],
                                (B, levels, levels))
    x = jnp.concatenate(
        [jnp.broadcast_to(obs[:, None, :], (B, levels, low_dim)),
         jnp.stack(prev, 1), level_id], axis=-1).reshape(B * levels, -1)
    ref = mlp_reference(x, params).reshape(B, levels, actor_dim, bins)
    assert jnp.allclose(qs, ref, atol=2e-3, rtol=2e-3), "Pallas MLP mismatch"

    idx_i = discrete.astype(jnp.int32)
    ref_qs_a = jnp.take_along_axis(ref, idx_i[..., None], axis=-1)[..., 0]
    assert jnp.allclose(qs_a, ref_qs_a, atol=2e-3, rtol=2e-3), "gather mismatch"

    print("KERNEL_OK")
</pallas_src>

<mosaic_0001>
module attributes {stable_mosaic.version = 11 : i64} {
  func.func @_mlp_kernel(%arg0: i32, %arg1: memref<32x128xbf16, #tpu.memory_space<vmem>>, %arg2: memref<128x128xbf16, #tpu.memory_space<vmem>>, %arg3: memref<128x128xbf16, #tpu.memory_space<vmem>>, %arg4: memref<128x128xbf16, #tpu.memory_space<vmem>>, %arg5: memref<8x128xf32, #tpu.memory_space<vmem>>, %arg6: memref<1x128xf32, #tpu.memory_space<vmem>>, %arg7: memref<32x128xf32, #tpu.memory_space<vmem>>) attributes {dimension_semantics = [#tpu.dimension_semantics<parallel>], iteration_bounds = array<i64: 1>, scalar_prefetch = 0 : i64, scratch_operands = 0 : i64, tpu.core_type = #tpu.core_type<tc>, window_params = [{transform_indices = @transform_0, window_bounds = array<i64: 32, 128>}, {pipeline_mode = #tpu.pipeline_mode<synchronous>, transform_indices = @transform_1, window_bounds = array<i64: 128, 128>}, {pipeline_mode = #tpu.pipeline_mode<synchronous>, transform_indices = @transform_2, window_bounds = array<i64: 128, 128>}, {pipeline_mode = #tpu.pipeline_mode<synchronous>, transform_indices = @transform_3, window_bounds = array<i64: 128, 128>}, {pipeline_mode = #tpu.pipeline_mode<synchronous>, transform_indices = @transform_4, window_bounds = array<i64: 8, 128>}, {pipeline_mode = #tpu.pipeline_mode<synchronous>, transform_indices = @transform_5, window_bounds = array<i64: 1, 128>}, {transform_indices = @transform_6, window_bounds = array<i64: 32, 128>}]} {
    %c0 = arith.constant 0 : index
    %c0_0 = arith.constant 0 : index
    %0 = vector.load %arg5[%c0, %c0_0] : memref<8x128xf32, #tpu.memory_space<vmem>>, vector<1x128xf32>
    %c1 = arith.constant 1 : index
    %c0_1 = arith.constant 0 : index
    %1 = vector.load %arg5[%c1, %c0_1] : memref<8x128xf32, #tpu.memory_space<vmem>>, vector<1x128xf32>
    %c2 = arith.constant 2 : index
    %c0_2 = arith.constant 0 : index
    %2 = vector.load %arg5[%c2, %c0_2] : memref<8x128xf32, #tpu.memory_space<vmem>>, vector<1x128xf32>
    %c3 = arith.constant 3 : index
    %c0_3 = arith.constant 0 : index
    %3 = vector.load %arg5[%c3, %c0_3] : memref<8x128xf32, #tpu.memory_space<vmem>>, vector<1x128xf32>
    %c4 = arith.constant 4 : index
    %c0_4 = arith.constant 0 : index
    %4 = vector.load %arg5[%c4, %c0_4] : memref<8x128xf32, #tpu.memory_space<vmem>>, vector<1x128xf32>
    %c5 = arith.constant 5 : index
    %c0_5 = arith.constant 0 : index
    %5 = vector.load %arg5[%c5, %c0_5] : memref<8x128xf32, #tpu.memory_space<vmem>>, vector<1x128xf32>
    %c0_6 = arith.constant 0 : index
    %c0_7 = arith.constant 0 : index
    %6 = vector.load %arg2[%c0_6, %c0_7] : memref<128x128xbf16, #tpu.memory_space<vmem>>, vector<128x128xbf16>
    %c0_8 = arith.constant 0 : index
    %c0_9 = arith.constant 0 : index
    %7 = vector.load %arg3[%c0_8, %c0_9] : memref<128x128xbf16, #tpu.memory_space<vmem>>, vector<128x128xbf16>
    %c0_10 = arith.constant 0 : index
    %c0_11 = arith.constant 0 : index
    %8 = vector.load %arg4[%c0_10, %c0_11] : memref<128x128xbf16, #tpu.memory_space<vmem>>, vector<128x128xbf16>
    %c0_12 = arith.constant 0 : index
    %c0_13 = arith.constant 0 : index
    %9 = vector.load %arg6[%c0_12, %c0_13] : memref<1x128xf32, #tpu.memory_space<vmem>>, vector<1x128xf32>
    %c0_14 = arith.constant 0 : index
    %c0_15 = arith.constant 0 : index
    %10 = vector.load %arg1[%c0_14, %c0_15] : memref<32x128xbf16, #tpu.memory_space<vmem>>, vector<16x128xbf16>
    %cst = arith.constant dense<0.000000e+00> : vector<16x128xf32>
    %11 = tpu.matmul %10, %6, %cst {dimension_numbers = #tpu.dot_dimension_numbers<[1], [0], [0], [1], [0, 0, 1, 1], [], []>} : vector<16x128xbf16>, vector<128x128xbf16>, vector<16x128xf32> -> vector<16x128xf32>
    %12 = vector.broadcast %0 : vector<1x128xf32> to vector<16x128xf32>
    %13 = arith.addf %11, %12 : vector<16x128xf32>
    %cst_16 = arith.constant dense<0.000000e+00> : vector<16xf32>
    %14 = vector.multi_reduction <add>, %13, %cst_16 [1] : vector<16x128xf32> to vector<16xf32>
    %15 = vector.shape_cast %14 : vector<16xf32> to vector<16x1xf32>
    %cst_17 = arith.constant 3.125000e-02 : f32
    %16 = vector.broadcast %cst_17 : f32 to vector<16x1xf32>
    %17 = arith.mulf %15, %16 : vector<16x1xf32>
    %18 = vector.broadcast %17 : vector<16x1xf32> to vector<16x128xf32>
    %19 = arith.subf %13, %18 : vector<16x128xf32>
    %20 = tpu.iota {dimensions = array<i32: 1>} : vector<16x128xi32>
    %c32_i32 = arith.constant 32 : i32
    %21 = vector.broadcast %c32_i32 : i32 to vector<16x128xi32>
    %22 = arith.cmpi slt, %20, %21 : vector<16x128xi32>
    %cst_18 = arith.constant 0.000000e+00 : f32
    %23 = vector.broadcast %cst_18 : f32 to vector<16x128xf32>
    %24 = arith.select %22, %19, %23 : vector<16x128xi1>, vector<16x128xf32>
    %25 = arith.mulf %24, %24 : vector<16x128xf32>
    %cst_19 = arith.constant dense<0.000000e+00> : vector<16xf32>
    %26 = vector.multi_reduction <add>, %25, %cst_19 [1] : vector<16x128xf32> to vector<16xf32>
    %27 = vector.shape_cast %26 : vector<16xf32> to vector<16x1xf32>
    %cst_20 = arith.constant 3.125000e-02 : f32
    %28 = vector.broadcast %cst_20 : f32 to vector<16x1xf32>
    %29 = arith.mulf %27, %28 : vector<16x1xf32>
    %cst_21 = arith.constant 9.99999974E-6 : f32
    %30 = vector.broadcast %cst_21 : f32 to vector<16x1xf32>
    %31 = arith.addf %29, %30 : vector<16x1xf32>
    %32 = math.rsqrt %31 : vector<16x1xf32>
    %33 = vector.broadcast %32 : vector<16x1xf32> to vector<16x128xf32>
    %34 = arith.mulf %19, %33 : vector<16x128xf32>
    %35 = vector.broadcast %1 : vector<1x128xf32> to vector<16x128xf32>
    %36 = arith.mulf %34, %35 : vector<16x128xf32>
    %37 = vector.broadcast %2 : vector<1x128xf32> to vector<16x128xf32>
    %38 = arith.addf %36, %37 : vector<16x128xf32>
    %39 = arith.negf %38 : vector<16x128xf32>
    %40 = math.exp %39 : vector<16x128xf32>
    %cst_22 = arith.constant 1.000000e+00 : f32
    %41 = vector.broadcast %cst_22 : f32 to vector<16x128xf32>
    %42 = arith.addf %41, %40 : vector<16x128xf32>
    %43 = arith.divf %41, %42 : vector<16x128xf32>
    %44 = arith.mulf %38, %43 : vector<16x128xf32>
    %45 = arith.truncf %44 : vector<16x128xf32> to vector<16x128xbf16>
    %cst_23 = arith.constant dense<0.000000e+00> : vector<16x128xf32>
    %46 = tpu.matmul %45, %7, %cst_23 {dimension_numbers = #tpu.dot_dimension_numbers<[1], [0], [0], [1], [0, 0, 1, 1], [], []>} : vector<16x128xbf16>, vector<128x128xbf16>, vector<16x128xf32> -> vector<16x128xf32>
    %47 = vector.broadcast %3 : vector<1x128xf32> to vector<16x128xf32>
    %48 = arith.addf %46, %47 : vector<16x128xf32>
    %cst_24 = arith.constant dense<0.000000e+00> : vector<16xf32>
    %49 = vector.multi_reduction <add>, %48, %cst_24 [1] : vector<16x128xf32> to vector<16xf32>
    %50 = vector.shape_cast %49 : vector<16xf32> to vector<16x1xf32>
    %cst_25 = arith.constant 3.125000e-02 : f32
    %51 = vector.broadcast %cst_25 : f32 to vector<16x1xf32>
    %52 = arith.mulf %50, %51 : vector<16x1xf32>
    %53 = vector.broadcast %52 : vector<16x1xf32> to vector<16x128xf32>
    %54 = arith.subf %48, %53 : vector<16x128xf32>
    %55 = tpu.iota {dimensions = array<i32: 1>} : vector<16x128xi32>
    %c32_i32_26 = arith.constant 32 : i32
    %56 = vector.broadcast %c32_i32_26 : i32 to vector<16x128xi32>
    %57 = arith.cmpi slt, %55, %56 : vector<16x128xi32>
    %cst_27 = arith.constant 0.000000e+00 : f32
    %58 = vector.broadcast %cst_27 : f32 to vector<16x128xf32>
    %59 = arith.select %57, %54, %58 : vector<16x128xi1>, vector<16x128xf32>
    %60 = arith.mulf %59, %59 : vector<16x128xf32>
    %cst_28 = arith.constant dense<0.000000e+00> : vector<16xf32>
    %61 = vector.multi_reduction <add>, %60, %cst_28 [1] : vector<16x128xf32> to vector<16xf32>
    %62 = vector.shape_cast %61 : vector<16xf32> to vector<16x1xf32>
    %cst_29 = arith.constant 3.125000e-02 : f32
    %63 = vector.broadcast %cst_29 : f32 to vector<16x1xf32>
    %64 = arith.mulf %62, %63 : vector<16x1xf32>
    %cst_30 = arith.constant 9.99999974E-6 : f32
    %65 = vector.broadcast %cst_30 : f32 to vector<16x1xf32>
    %66 = arith.addf %64, %65 : vector<16x1xf32>
    %67 = math.rsqrt %66 : vector<16x1xf32>
    %68 = vector.broadcast %67 : vector<16x1xf32> to vector<16x128xf32>
    %69 = arith.mulf %54, %68 : vector<16x128xf32>
    %70 = vector.broadcast %4 : vector<1x128xf32> to vector<16x128xf32>
    %71 = arith.mulf %69, %70 : vector<16x128xf32>
    %72 = vector.broadcast %5 : vector<1x128xf32> to vector<16x128xf32>
    %73 = arith.addf %71, %72 : vector<16x128xf32>
    %74 = arith.negf %73 : vector<16x128xf32>
    %75 = math.exp %74 : vector<16x128xf32>
    %cst_31 = arith.constant 1.000000e+00 : f32
    %76 = vector.broadcast %cst_31 : f32 to vector<16x128xf32>
    %77 = arith.addf %76, %75 : vector<16x128xf32>
    %78 = arith.divf %76, %77 : vector<16x128xf32>
    %79 = arith.mulf %73, %78 : vector<16x128xf32>
    %80 = arith.truncf %79 : vector<16x128xf32> to vector<16x128xbf16>
    %cst_32 = arith.constant dense<0.000000e+00> : vector<16x128xf32>
    %81 = tpu.matmul %80, %8, %cst_32 {dimension_numbers = #tpu.dot_dimension_numbers<[1], [0], [0], [1], [0, 0, 1, 1], [], []>} : vector<16x128xbf16>, vector<128x128xbf16>, vector<16x128xf32> -> vector<16x128xf32>
    %82 = vector.broadcast %9 : vector<1x128xf32> to vector<16x128xf32>
    %83 = arith.addf %81, %82 : vector<16x128xf32>
    %c0_33 = arith.constant 0 : index
    %c0_34 = arith.constant 0 : index
    %84 = vector.load %arg7[%c0_33, %c0_34] : memref<32x128xf32, #tpu.memory_space<vmem>>, vector<16x128xf32>
    tpu.vector_store %arg7[%c0_33, %c0_34], %83 {strides = array<i32>} : memref<32x128xf32, #tpu.memory_space<vmem>>, vector<16x128xf32>,
    %c16 = arith.constant 16 : index
    %c0_35 = arith.constant 0 : index
    %85 = vector.load %arg1[%c16, %c0_35] : memref<32x128xbf16, #tpu.memory_space<vmem>>, vector<16x128xbf16>
    %cst_36 = arith.constant dense<0.000000e+00> : vector<16x128xf32>
    %86 = tpu.matmul %85, %6, %cst_36 {dimension_numbers = #tpu.dot_dimension_numbers<[1], [0], [0], [1], [0, 0, 1, 1], [], []>} : vector<16x128xbf16>, vector<128x128xbf16>, vector<16x128xf32> -> vector<16x128xf32>
    %87 = vector.broadcast %0 : vector<1x128xf32> to vector<16x128xf32>
    %88 = arith.addf %86, %87 : vector<16x128xf32>
    %cst_37 = arith.constant dense<0.000000e+00> : vector<16xf32>
    %89 = vector.multi_reduction <add>, %88, %cst_37 [1] : vector<16x128xf32> to vector<16xf32>
    %90 = vector.shape_cast %89 : vector<16xf32> to vector<16x1xf32>
    %cst_38 = arith.constant 3.125000e-02 : f32
    %91 = vector.broadcast %cst_38 : f32 to vector<16x1xf32>
    %92 = arith.mulf %90, %91 : vector<16x1xf32>
    %93 = vector.broadcast %92 : vector<16x1xf32> to vector<16x128xf32>
    %94 = arith.subf %88, %93 : vector<16x128xf32>
    %95 = tpu.iota {dimensions = array<i32: 1>} : vector<16x128xi32>
    %c32_i32_39 = arith.constant 32 : i32
    %96 = vector.broadcast %c32_i32_39 : i32 to vector<16x128xi32>
    %97 = arith.cmpi slt, %95, %96 : vector<16x128xi32>
    %cst_40 = arith.constant 0.000000e+00 : f32
    %98 = vector.broadcast %cst_40 : f32 to vector<16x128xf32>
    %99 = arith.select %97, %94, %98 : vector<16x128xi1>, vector<16x128xf32>
    %100 = arith.mulf %99, %99 : vector<16x128xf32>
    %cst_41 = arith.constant dense<0.000000e+00> : vector<16xf32>
    %101 = vector.multi_reduction <add>, %100, %cst_41 [1] : vector<16x128xf32> to vector<16xf32>
    %102 = vector.shape_cast %101 : vector<16xf32> to vector<16x1xf32>
    %cst_42 = arith.constant 3.125000e-02 : f32
    %103 = vector.broadcast %cst_42 : f32 to vector<16x1xf32>
    %104 = arith.mulf %102, %103 : vector<16x1xf32>
    %cst_43 = arith.constant 9.99999974E-6 : f32
    %105 = vector.broadcast %cst_43 : f32 to vector<16x1xf32>
    %106 = arith.addf %104, %105 : vector<16x1xf32>
    %107 = math.rsqrt %106 : vector<16x1xf32>
    %108 = vector.broadcast %107 : vector<16x1xf32> to vector<16x128xf32>
    %109 = arith.mulf %94, %108 : vector<16x128xf32>
    %110 = vector.broadcast %1 : vector<1x128xf32> to vector<16x128xf32>
    %111 = arith.mulf %109, %110 : vector<16x128xf32>
    %112 = vector.broadcast %2 : vector<1x128xf32> to vector<16x128xf32>
    %113 = arith.addf %111, %112 : vector<16x128xf32>
    %114 = arith.negf %113 : vector<16x128xf32>
    %115 = math.exp %114 : vector<16x128xf32>
    %cst_44 = arith.constant 1.000000e+00 : f32
    %116 = vector.broadcast %cst_44 : f32 to vector<16x128xf32>
    %117 = arith.addf %116, %115 : vector<16x128xf32>
    %118 = arith.divf %116, %117 : vector<16x128xf32>
    %119 = arith.mulf %113, %118 : vector<16x128xf32>
    %120 = arith.truncf %119 : vector<16x128xf32> to vector<16x128xbf16>
    %cst_45 = arith.constant dense<0.000000e+00> : vector<16x128xf32>
    %121 = tpu.matmul %120, %7, %cst_45 {dimension_numbers = #tpu.dot_dimension_numbers<[1], [0], [0], [1], [0, 0, 1, 1], [], []>} : vector<16x128xbf16>, vector<128x128xbf16>, vector<16x128xf32> -> vector<16x128xf32>
    %122 = vector.broadcast %3 : vector<1x128xf32> to vector<16x128xf32>
    %123 = arith.addf %121, %122 : vector<16x128xf32>
    %cst_46 = arith.constant dense<0.000000e+00> : vector<16xf32>
    %124 = vector.multi_reduction <add>, %123, %cst_46 [1] : vector<16x128xf32> to vector<16xf32>
    %125 = vector.shape_cast %124 : vector<16xf32> to vector<16x1xf32>
    %cst_47 = arith.constant 3.125000e-02 : f32
    %126 = vector.broadcast %cst_47 : f32 to vector<16x1xf32>
    %127 = arith.mulf %125, %126 : vector<16x1xf32>
    %128 = vector.broadcast %127 : vector<16x1xf32> to vector<16x128xf32>
    %129 = arith.subf %123, %128 : vector<16x128xf32>
    %130 = tpu.iota {dimensions = array<i32: 1>} : vector<16x128xi32>
    %c32_i32_48 = arith.constant 32 : i32
    %131 = vector.broadcast %c32_i32_48 : i32 to vector<16x128xi32>
    %132 = arith.cmpi slt, %130, %131 : vector<16x128xi32>
    %cst_49 = arith.constant 0.000000e+00 : f32
    %133 = vector.broadcast %cst_49 : f32 to vector<16x128xf32>
    %134 = arith.select %132, %129, %133 : vector<16x128xi1>, vector<16x128xf32>
    %135 = arith.mulf %134, %134 : vector<16x128xf32>
    %cst_50 = arith.constant dense<0.000000e+00> : vector<16xf32>
    %136 = vector.multi_reduction <add>, %135, %cst_50 [1] : vector<16x128xf32> to vector<16xf32>
    %137 = vector.shape_cast %136 : vector<16xf32> to vector<16x1xf32>
    %cst_51 = arith.constant 3.125000e-02 : f32
    %138 = vector.broadcast %cst_51 : f32 to vector<16x1xf32>
    %139 = arith.mulf %137, %138 : vector<16x1xf32>
    %cst_52 = arith.constant 9.99999974E-6 : f32
    %140 = vector.broadcast %cst_52 : f32 to vector<16x1xf32>
    %141 = arith.addf %139, %140 : vector<16x1xf32>
    %142 = math.rsqrt %141 : vector<16x1xf32>
    %143 = vector.broadcast %142 : vector<16x1xf32> to vector<16x128xf32>
    %144 = arith.mulf %129, %143 : vector<16x128xf32>
    %145 = vector.broadcast %4 : vector<1x128xf32> to vector<16x128xf32>
    %146 = arith.mulf %144, %145 : vector<16x128xf32>
    %147 = vector.broadcast %5 : vector<1x128xf32> to vector<16x128xf32>
    %148 = arith.addf %146, %147 : vector<16x128xf32>
    %149 = arith.negf %148 : vector<16x128xf32>
    %150 = math.exp %149 : vector<16x128xf32>
    %cst_53 = arith.constant 1.000000e+00 : f32
    %151 = vector.broadcast %cst_53 : f32 to vector<16x128xf32>
    %152 = arith.addf %151, %150 : vector<16x128xf32>
    %153 = arith.divf %151, %152 : vector<16x128xf32>
    %154 = arith.mulf %148, %153 : vector<16x128xf32>
    %155 = arith.truncf %154 : vector<16x128xf32> to vector<16x128xbf16>
    %cst_54 = arith.constant dense<0.000000e+00> : vector<16x128xf32>
    %156 = tpu.matmul %155, %8, %cst_54 {dimension_numbers = #tpu.dot_dimension_numbers<[1], [0], [0], [1], [0, 0, 1, 1], [], []>} : vector<16x128xbf16>, vector<128x128xbf16>, vector<16x128xf32> -> vector<16x128xf32>
    %157 = vector.broadcast %9 : vector<1x128xf32> to vector<16x128xf32>
    %158 = arith.addf %156, %157 : vector<16x128xf32>
    %c16_55 = arith.constant 16 : index
    %c0_56 = arith.constant 0 : index
    %159 = vector.load %arg7[%c16_55, %c0_56] : memref<32x128xf32, #tpu.memory_space<vmem>>, vector<16x128xf32>
    tpu.vector_store %arg7[%c16_55, %c0_56], %158 {strides = array<i32>} : memref<32x128xf32, #tpu.memory_space<vmem>>, vector<16x128xf32>,
    return
  }
  func.func @transform_0(%arg0: i32) -> (i32, i32) {
    %c0_i32 = arith.constant 0 : i32
    %c0_i32_0 = arith.constant 0 : i32
    return %arg0, %c0_i32 : i32, i32
  }
  func.func @transform_1(%arg0: i32) -> (i32, i32) {
    %c0_i32 = arith.constant 0 : i32
    %c0_i32_0 = arith.constant 0 : i32
    %c0_i32_1 = arith.constant 0 : i32
    return %c0_i32, %c0_i32_0 : i32, i32
  }
  func.func @transform_2(%arg0: i32) -> (i32, i32) {
    %c0_i32 = arith.constant 0 : i32
    %c0_i32_0 = arith.constant 0 : i32
    %c0_i32_1 = arith.constant 0 : i32
    return %c0_i32, %c0_i32_0 : i32, i32
  }
  func.func @transform_3(%arg0: i32) -> (i32, i32) {
    %c0_i32 = arith.constant 0 : i32
    %c0_i32_0 = arith.constant 0 : i32
    %c0_i32_1 = arith.constant 0 : i32
    return %c0_i32, %c0_i32_0 : i32, i32
  }
  func.func @transform_4(%arg0: i32) -> (i32, i32) {
    %c0_i32 = arith.constant 0 : i32
    %c0_i32_0 = arith.constant 0 : i32
    %c0_i32_1 = arith.constant 0 : i32
    return %c0_i32, %c0_i32_0 : i32, i32
  }
  func.func @transform_5(%arg0: i32) -> (i32, i32) {
    %c0_i32 = arith.constant 0 : i32
    %c0_i32_0 = arith.constant 0 : i32
    %c0_i32_1 = arith.constant 0 : i32
    return %c0_i32, %c0_i32_0 : i32, i32
  }
  func.func @transform_6(%arg0: i32) -> (i32, i32) {
    %c0_i32 = arith.constant 0 : i32
    %c0_i32_0 = arith.constant 0 : i32
    return %arg0, %c0_i32 : i32, i32
  }
}

</mosaic_0001>

<llo_original>
// kernel: tpu_custom_call.1
$region0: #{tpu_custom_call.1}
  #allocation0 [shape = 'u32[]', space=smem, size = 0x4, offset = 0x4, fixed_abs, tag = 'smem constant byte address 0x4 - core index']
  #allocation1 [shape = 'u32[144,128]{1,0:T(1,128)}', space=vmem, size = 0x12000, scoped, tag = 'internal scratch']
  %s0 = inlined_call_operand.hbm [shape: bf16[32,128], index: 0, kind: input, shape index: {}]
  %s1 = inlined_call_operand.hbm [shape: bf16[128,128], index: 1, kind: input, shape index: {}]
  %s2 = inlined_call_operand.hbm [shape: bf16[128,128], index: 2, kind: input, shape index: {}]
  %s3 = inlined_call_operand.hbm [shape: bf16[128,128], index: 3, kind: input, shape index: {}]
  %s4 = inlined_call_operand.vmem [shape: f32[8,128], index: 4, kind: input, shape index: {}]
  %s5 = inlined_call_operand.vmem [shape: f32[1,128], index: 5, kind: input, shape index: {}]
  %s6 = inlined_call_operand.hbm [shape: f32[32,128], index: 6, kind: output, shape index: {}]
  %s7 = sld [smem:[#allocation0]]
  $region50: #{tpu_custom_call.1} parent=0
    _
  %s9 = ssub.s32 1, %s7
  %s10 = scalar_select 0, %s9, %s7
  $region1: #{tpu_custom_call.1} parent=0
    #allocation2 [shape = 'u8[8192]{0}', space=vmem, size = 0x2000, scoped, tag = 'input window, operand 0, single buffered']
    #allocation3 [shape = 's32[1]{0}', space=sflag, size = 0x4, scoped, tag = 'scoped memory for tpu_custom_call.1']
    #allocation4 [shape = 's32[1]{0}', space=sflag, size = 0x4, scoped, tag = 'scoped memory for tpu_custom_call.1']
    #allocation5 [shape = 'u8[32768]{0}', space=vmem, size = 0x8000, scoped, tag = 'input window, operand 1, single buffered']
    #allocation6 [shape = 's32[1]{0}', space=sflag, size = 0x4, scoped, tag = 'scoped memory for tpu_custom_call.1']
    #allocation7 [shape = 'u8[32768]{0}', space=vmem, size = 0x8000, scoped, tag = 'input window, operand 2, single buffered']
    #allocation8 [shape = 'u8[32768]{0}', space=vmem, size = 0x8000, scoped, tag = 'input window, operand 3, single buffered']
    #allocation9 [shape = 's32[1]{0}', space=sflag, size = 0x4, scoped, tag = 'scoped memory for tpu_custom_call.1']
    #allocation10 [shape = 'u8[16384]{0}', space=vmem, size = 0x4000, scoped, tag = 'output window, operand 0, single buffered']
    %11 = vsyncpa [#allocation3], 0
    %12 = vsyncpa [#allocation6], 0
    %13 = vsyncpa [#allocation9], 0
    %14 = vsyncpa [#allocation4], 0
    // Predicated region
    $region2: #{tpu_custom_call.1} parent=1 // pred_check
      _
    $region3: #{tpu_custom_call.1} parent=1 // pred_check_branch
      %16 = sbr.rel (0) target = $region5
    $region4: #{tpu_custom_call.1} parent=1 // pred_region
      %s18 = ssub.s32 256, 256
      %19 = vsyncadd [#allocation3], %s18
      %s20 = sshll.u32 [#allocation2], 4
      %s21 = int_to_ptr.vmem [resolvable:$true] %s20
      %26 = dma.hbm_to_vmem [thread:$0]  %s0, 256, %s21, [#allocation3], 64, 64, 4
    $region5: #{tpu_custom_call.1} parent=1 // pred_fallthru
      _
    // Predicated region
    $region6: #{tpu_custom_call.1} parent=1 // pred_check
      _
    $region7: #{tpu_custom_call.1} parent=1 // pred_check_branch
      %28 = sbr.rel (0) target = $region9
    $region8: #{tpu_custom_call.1} parent=1 // pred_region
      %s30 = ssub.s32 1024, 1024
      %31 = vsyncadd [#allocation6], %s30
      %s32 = sshll.u32 [#allocation5], 4
      %s33 = int_to_ptr.vmem [resolvable:$true] %s32
      %38 = dma.hbm_to_vmem [thread:$0]  %s1, 1024, %s33, [#allocation6], 64, 64, 4
    $region9: #{tpu_custom_call.1} parent=1 // pred_fallthru
      _
    // Predicated region
    $region10: #{tpu_custom_call.1} parent=1 // pred_check
      _
    $region11: #{tpu_custom_call.1} parent=1 // pred_check_branch
      %40 = sbr.rel (0) target = $region13
    $region12: #{tpu_custom_call.1} parent=1 // pred_region
      %s42 = ssub.s32 1024, 1024
      %43 = vsyncadd [#allocation6], %s42
      %s44 = sshll.u32 [#allocation7], 4
      %s45 = int_to_ptr.vmem [resolvable:$true] %s44
      %50 = dma.hbm_to_vmem [thread:$0]  %s2, 1024, %s45, [#allocation6], 64, 64, 4
    $region13: #{tpu_custom_call.1} parent=1 // pred_fallthru
      _
    // Predicated region
    $region14: #{tpu_custom_call.1} parent=1 // pred_check
      _
    $region15: #{tpu_custom_call.1} parent=1 // pred_check_branch
      %52 = sbr.rel (0) target = $region17
    $region16: #{tpu_custom_call.1} parent=1 // pred_region
      %s54 = ssub.s32 1024, 1024
      %55 = vsyncadd [#allocation9], %s54
      %s56 = sshll.u32 [#allocation8], 4
      %s57 = int_to_ptr.vmem [resolvable:$true] %s56
      %62 = dma.hbm_to_vmem [thread:$0]  %s3, 1024, %s57, [#allocation9], 64, 64, 4
    $region17: #{tpu_custom_call.1} parent=1 // pred_fallthru
      _
    // Predicated region
    $region18: #{tpu_custom_call.1} parent=1 // pred_check
      _
    $region19: #{tpu_custom_call.1} parent=1 // pred_check_branch
      %64 = sbr.rel (0) target = $region21
    $region20: #{tpu_custom_call.1} parent=1 // pred_region
      _
    $region21: #{tpu_custom_call.1} parent=1 // pred_fallthru
      _
    // Predicated region
    $region22: #{tpu_custom_call.1} parent=1 // pred_check
      _
    $region23: #{tpu_custom_call.1} parent=1 // pred_check_branch
      %66 = sbr.rel (0) target = $region25
    $region24: #{tpu_custom_call.1} parent=1 // pred_region
      _
    $region25: #{tpu_custom_call.1} parent=1 // pred_fallthru
      _
    // Predicated region
    $region26: #{tpu_custom_call.1} parent=1 // pred_check
      _
    $region27: #{tpu_custom_call.1} parent=1 // pred_check_branch
      %68 = sbr.rel (0) target = $region29
    $region28: #{tpu_custom_call.1} parent=1 // pred_region
      %69 = dma.done [#allocation3], 256
    $region29: #{tpu_custom_call.1} parent=1 // pred_fallthru
      _
    // Predicated region
    $region30: #{tpu_custom_call.1} parent=1 // pred_check
      _
    $region31: #{tpu_custom_call.1} parent=1 // pred_check_branch
      %71 = sbr.rel (0) target = $region33
    $region32: #{tpu_custom_call.1} parent=1 // pred_region
      %72 = dma.done [#allocation6], 1024
    $region33: #{tpu_custom_call.1} parent=1 // pred_fallthru
      _
    // Predicated region
    $region34: #{tpu_custom_call.1} parent=1 // pred_check
      _
    $region35: #{tpu_custom_call.1} parent=1 // pred_check_branch
      %74 = sbr.rel (0) target = $region37
    $region36: #{tpu_custom_call.1} parent=1 // pred_region
      %75 = dma.done [#allocation6], 1024
    $region37: #{tpu_custom_call.1} parent=1 // pred_fallthru
      _
    // Predicated region
    $region38: #{tpu_custom_call.1} parent=1 // pred_check
      _
    $region39: #{tpu_custom_call.1} parent=1 // pred_check_branch
      %77 = sbr.rel (0) target = $region41
    $region40: #{tpu_custom_call.1} parent=1 // pred_region
      %78 = dma.done [#allocation9], 1024
    $region41: #{tpu_custom_call.1} parent=1 // pred_fallthru
      _
    %v80 = vld [vmem:[%s4] sm:$0x1]
    %v81 = vld [vmem:[%s4 + $0x1] sm:$0x1]
    %v82 = vld [vmem:[%s4 + $0x2] sm:$0x1]
    %v83 = vld [vmem:[%s4 + $0x3] sm:$0x1]
    %v84 = vld [vmem:[%s4 + $0x4] sm:$0x1]
    %v85 = vld [vmem:[%s4 + $0x5] sm:$0x1]
    %v86 = vld [vmem:[#allocation5] sm:$0xf]
    %v87 = vld [vmem:[#allocation5 + $0x4] sm:$0xf]
    %v88 = vld [vmem:[#allocation5 + $0x8] sm:$0xf]
    %v89 = vld [vmem:[#allocation5 + $0xc] sm:$0xf]
    %v90 = vld [vmem:[#allocation5 + $0x10] sm:$0xf]
    %v91 = vld [vmem:[#allocation5 + $0x14] sm:$0xf]
    %v92 = vld [vmem:[#allocation5 + $0x18] sm:$0xf]
    %v93 = vld [vmem:[#allocation5 + $0x1c] sm:$0xf]
    %v94 = vld [vmem:[#allocation5 + $0x20] sm:$0xf]
    %v95 = vld [vmem:[#allocation5 + $0x24] sm:$0xf]
    %v96 = vld [vmem:[#allocation5 + $0x28] sm:$0xf]
    %v97 = vld [vmem:[#allocation5 + $0x2c] sm:$0xf]
    %v98 = vld [vmem:[#allocation5 + $0x30] sm:$0xf]
    %v99 = vld [vmem:[#allocation5 + $0x34] sm:$0xf]
    %v100 = vld [vmem:[#allocation5 + $0x38] sm:$0xf]
    %v101 = vld [vmem:[#allocation5 + $0x3c] sm:$0xf]
    %v102 = vld [vmem:[#allocation7] sm:$0xf]
    %v103 = vld [vmem:[#allocation7 + $0x4] sm:$0xf]
    %v104 = vld [vmem:[#allocation7 + $0x8] sm:$0xf]
    %v105 = vld [vmem:[#allocation7 + $0xc] sm:$0xf]
    %v106 = vld [vmem:[#allocation7 + $0x10] sm:$0xf]
    %v107 = vld [vmem:[#allocation7 + $0x14] sm:$0xf]
    %v108 = vld [vmem:[#allocation7 + $0x18] sm:$0xf]
    %v109 = vld [vmem:[#allocation7 + $0x1c] sm:$0xf]
    %v110 = vld [vmem:[#allocation7 + $0x20] sm:$0xf]
    %v111 = vld [vmem:[#allocation7 + $0x24] sm:$0xf]
    %v112 = vld [vmem:[#allocation7 + $0x28] sm:$0xf]
    %v113 = vld [vmem:[#allocation7 + $0x2c] sm:$0xf]
    %v114 = vld [vmem:[#allocation7 + $0x30] sm:$0xf]
    %v115 = vld [vmem:[#allocation7 + $0x34] sm:$0xf]
    %v116 = vld [vmem:[#allocation7 + $0x38] sm:$0xf]
    %v117 = vld [vmem:[#allocation7 + $0x3c] sm:$0xf]
    %v118 = vld [vmem:[#allocation8] sm:$0xf]
    %v119 = vld [vmem:[#allocation8 + $0x4] sm:$0xf]
    %v120 = vld [vmem:[#allocation8 + $0x8] sm:$0xf]
    %v121 = vld [vmem:[#allocation8 + $0xc] sm:$0xf]
    %v122 = vld [vmem:[#allocation8 + $0x10] sm:$0xf]
    %v123 = vld [vmem:[#allocation8 + $0x14] sm:$0xf]
    %v124 = vld [vmem:[#allocation8 + $0x18] sm:$0xf]
    %v125 = vld [vmem:[#allocation8 + $0x1c] sm:$0xf]
    %v126 = vld [vmem:[#allocation8 + $0x20] sm:$0xf]
    %v127 = vld [vmem:[#allocation8 + $0x24] sm:$0xf]
    %v128 = vld [vmem:[#allocation8 + $0x28] sm:$0xf]
    %v129 = vld [vmem:[#allocation8 + $0x2c] sm:$0xf]
    %v130 = vld [vmem:[#allocation8 + $0x30] sm:$0xf]
    %v131 = vld [vmem:[#allocation8 + $0x34] sm:$0xf]
    %v132 = vld [vmem:[#allocation8 + $0x38] sm:$0xf]
    %v133 = vld [vmem:[#allocation8 + $0x3c] sm:$0xf]
    %v134 = vld [vmem:[%s5] sm:$0x1]
    %v135 = vld [vmem:[#allocation2] sm:$0xf]
    %v136 = vld [vmem:[#allocation2 + $0x4] sm:$0xf]
    %v137 = vlaneseq
    %v138 = vshrl.u32 %v137, 7
    %v139 = vsub.s32 0, %v138
    %v140 = vrot.slane %v80, %v139
    %v143 = vunpack.c.l.b16 %v135
    %v144 = vunpack.c.l.b16 %v136
    %v145 = vpack.c.b16 %v144, %v143
    %v163 = vunpack.c.l.b16 %v86
    %v164 = vunpack.c.l.b16 %v87
    %v165 = vunpack.c.l.b16 %v88
    %v166 = vunpack.c.l.b16 %v89
    %v167 = vunpack.c.l.b16 %v90
    %v168 = vunpack.c.l.b16 %v91
    %v169 = vunpack.c.l.b16 %v92
    %v170 = vunpack.c.l.b16 %v93
    %v171 = vunpack.c.l.b16 %v94
    %v172 = vunpack.c.l.b16 %v95
    %v173 = vunpack.c.l.b16 %v96
    %v174 = vunpack.c.l.b16 %v97
    %v175 = vunpack.c.l.b16 %v98
    %v176 = vunpack.c.l.b16 %v99
    %v177 = vunpack.c.l.b16 %v100
    %v178 = vunpack.c.l.b16 %v101
    %v179 = vpack.c.b16 %v164, %v163
    %v180 = vpack.c.b16 %v166, %v165
    %v181 = vpack.c.b16 %v168, %v167
    %v182 = vpack.c.b16 %v170, %v169
    %v183 = vpack.c.b16 %v172, %v171
    %v184 = vpack.c.b16 %v174, %v173
    %v185 = vpack.c.b16 %v176, %v175
    %v186 = vpack.c.b16 %v178, %v177
    %195 = vmatprep.subr.bf16.mxu0 0
    %196 = vmatpush1.bf16.msra.mxu0 %v179
    %197 = vmatprep.subr.bf16.mxu0 0
    %198 = vmatpush1.bf16.msra.mxu0 %v180
    %199 = vmatprep.subr.bf16.mxu0 0
    %200 = vmatpush1.bf16.msra.mxu0 %v181
    %201 = vmatprep.subr.bf16.mxu0 0
    %202 = vmatpush1.bf16.msra.mxu0 %v182
    %203 = vmatprep.subr.bf16.mxu0 0
    %204 = vmatpush1.bf16.msra.mxu0 %v183
    %205 = vmatprep.subr.bf16.mxu0 0
    %206 = vmatpush1.bf16.msra.mxu0 %v184
    %207 = vmatprep.subr.bf16.mxu0 0
    %208 = vmatpush1.bf16.msra.mxu0 %v185
    %209 = vmatprep.subr.bf16.mxu0 0
    %210 = vmatpush1.bf16.msra.mxu0 %v186
    %211 = vmatprep.subr.bf16.mxu0 0
    %212 = vmatpush1.bf16.msra.mxu0 0
    %213 = vmatprep.subr.bf16.mxu0 0
    %214 = vmatpush1.bf16.msra.mxu0 0
    %215 = vmatprep.subr.bf16.mxu0 0
    %216 = vmatpush1.bf16.msra.mxu0 0
    %217 = vmatprep.subr.bf16.mxu0 0
    %218 = vmatpush1.bf16.msra.mxu0 0
    %219 = vmatprep.subr.bf16.mxu0 0
    %220 = vmatpush1.bf16.msra.mxu0 0
    %221 = vmatprep.subr.bf16.mxu0 0
    %222 = vmatpush1.bf16.msra.mxu0 0
    %223 = vmatprep.subr.bf16.mxu0 0
    %224 = vmatpush1.bf16.msra.mxu0 0
    %225 = vmatprep.subr.bf16.mxu0 0
    %226 = vmatpush1.bf16.msra.mxu0 0
    %227 = vmatprep.mubr.bf16.mxu0 0
    %228 = vmatmul.mubr.bf16.gmra.mrb[0].mxu0 %v145
    %v229 = vpop.f32.mrb[0].mxu0
    %v230 = vadd.f32 %v140, %v229
    %v231 = vpop.f32.mrb[0].mxu0
    %v232 = vpop.f32.mrb[0].mxu0
    %v233 = vadd.f32 %v140, %v232
    %v234 = vpop.f32.mrb[0].mxu0
    %235 = vdwg.mxu0
    %236 = vadd.xlane.f32.xlu0 %v230
    %v237 = vpop.xlane.xlu0 %236
    %238 = vadd.xlane.f32.xlu0 %v233
    %v239 = vpop.xlane.xlu0 %238
    %v240 = vmul.f32 %v237, 0.03125
    %v241 = vmul.f32 %v239, 0.03125
    %v242 = vsub.f32 %v230, %v240
    %v243 = vsub.f32 %v233, %v241
    %v244 = vlaneseq
    %v245 = vand.u32 %v244, 127
    %vm246 = vcmp.lt.s32.totalorder %v245, 32
    %v247 = vsel %vm246, %v242, 0.0
    %v248 = vsel %vm246, %v243, 0.0
    %v249 = vmul.f32 %v247, %v247
    %v250 = vmul.f32 %v248, %v248
    %251 = vadd.xlane.f32.xlu0 %v249
    %v252 = vpop.xlane.xlu0 %251
    %253 = vadd.xlane.f32.xlu0 %v250
    %v254 = vpop.xlane.xlu0 %253
    %v255 = vmul.f32 %v252, 0.03125
    %v256 = vmul.f32 %v254, 0.03125
    %v257 = vadd.f32 %v255, 1e-05
    %v258 = vadd.f32 %v256, 1e-05
    %v259 = vrsqrt.pop %v257
    %v260 = vrsqrt.pop %v258
    %v261 = vmul.f32 %v242, %v259
    %v262 = vmul.f32 %v243, %v260
    %v263 = vlaneseq
    %v264 = vshrl.u32 %v263, 7
    %v265 = vsub.s32 0, %v264
    %v266 = vrot.slane %v81, %v265
    %v267 = vmul.f32 %v261, %v266
    %v268 = vmul.f32 %v262, %v266
    %v269 = vlaneseq
    %v270 = vshrl.u32 %v269, 7
    %v271 = vsub.s32 0, %v270
    %v272 = vrot.slane %v82, %v271
    %v273 = vadd.f32 %v267, %v272
    %v274 = vadd.f32 %v268, %v272
    %v275 = vxor.u32 %v273, 2147483648
    %v276 = vxor.u32 %v274, 2147483648
    %v277 = vmul.f32 %v275, 1.442695
    %v278 = vpow.pop %v277
    %v279 = vmul.f32 %v276, 1.442695
    %v280 = vpow.pop %v279
    %v281 = vadd.f32 %v278, 1.0
    %v282 = vadd.f32 %v280, 1.0
    %v283 = vrcp.pop %v281
    %v284 = vmul.f32 1.0, %v283
    %v285 = vrcp.pop %v282
    %v286 = vmul.f32 1.0, %v285
    %v287 = vmul.f32 %v273, %v284
    %v288 = vmul.f32 %v274, %v286
    %v289 = vpack.c.bf16 %v288, %v287
    %v290 = vlaneseq
    %v291 = vshrl.u32 %v290, 7
    %v292 = vsub.s32 0, %v291
    %v293 = vrot.slane %v83, %v292
    %v310 = vunpack.c.l.b16 %v102
    %v311 = vunpack.c.l.b16 %v103
    %v312 = vunpack.c.l.b16 %v104
    %v313 = vunpack.c.l.b16 %v105
    %v314 = vunpack.c.l.b16 %v106
    %v315 = vunpack.c.l.b16 %v107
    %v316 = vunpack.c.l.b16 %v108
    %v317 = vunpack.c.l.b16 %v109
    %v318 = vunpack.c.l.b16 %v110
    %v319 = vunpack.c.l.b16 %v111
    %v320 = vunpack.c.l.b16 %v112
    %v321 = vunpack.c.l.b16 %v113
    %v322 = vunpack.c.l.b16 %v114
    %v323 = vunpack.c.l.b16 %v115
    %v324 = vunpack.c.l.b16 %v116
    %v325 = vunpack.c.l.b16 %v117
    %v326 = vpack.c.b16 %v311, %v310
    %v327 = vpack.c.b16 %v313, %v312
    %v328 = vpack.c.b16 %v315, %v314
    %v329 = vpack.c.b16 %v317, %v316
    %v330 = vpack.c.b16 %v319, %v318
    %v331 = vpack.c.b16 %v321, %v320
    %v332 = vpack.c.b16 %v323, %v322
    %v333 = vpack.c.b16 %v325, %v324
    %342 = vmatprep.subr.bf16.mxu0 0
    %343 = vmatpush1.bf16.msra.mxu0 %v326
    %344 = vmatprep.subr.bf16.mxu0 0
    %345 = vmatpush1.bf16.msra.mxu0 %v327
    %346 = vmatprep.subr.bf16.mxu0 0
    %347 = vmatpush1.bf16.msra.mxu0 %v328
    %348 = vmatprep.subr.bf16.mxu0 0
    %349 = vmatpush1.bf16.msra.mxu0 %v329
    %350 = vmatprep.subr.bf16.mxu0 0
    %351 = vmatpush1.bf16.msra.mxu0 %v330
    %352 = vmatprep.subr.bf16.mxu0 0
    %353 = vmatpush1.bf16.msra.mxu0 %v331
    %354 = vmatprep.subr.bf16.mxu0 0
    %355 = vmatpush1.bf16.msra.mxu0 %v332
    %356 = vmatprep.subr.bf16.mxu0 0
    %357 = vmatpush1.bf16.msra.mxu0 %v333
    %358 = vmatprep.subr.bf16.mxu0 0
    %359 = vmatpush1.bf16.msra.mxu0 0
    %360 = vmatprep.subr.bf16.mxu0 0
    %361 = vmatpush1.bf16.msra.mxu0 0
    %362 = vmatprep.subr.bf16.mxu0 0
    %363 = vmatpush1.bf16.msra.mxu0 0
    %364 = vmatprep.subr.bf16.mxu0 0
    %365 = vmatpush1.bf16.msra.mxu0 0
    %366 = vmatprep.subr.bf16.mxu0 0
    %367 = vmatpush1.bf16.msra.mxu0 0
    %368 = vmatprep.subr.bf16.mxu0 0
    %369 = vmatpush1.bf16.msra.mxu0 0
    %370 = vmatprep.subr.bf16.mxu0 0
    %371 = vmatpush1.bf16.msra.mxu0 0
    %372 = vmatprep.subr.bf16.mxu0 0
    %373 = vmatpush1.bf16.msra.mxu0 0
    %374 = vmatprep.mubr.bf16.mxu0 0
    %375 = vmatmul.mubr.bf16.gmra.mrb[0].mxu0 %v289
    %v376 = vpop.f32.mrb[0].mxu0
    %v377 = vadd.f32 %v293, %v376
    %v378 = vpop.f32.mrb[0].mxu0
    %v379 = vpop.f32.mrb[0].mxu0
    %v380 = vadd.f32 %v293, %v379
    %v381 = vpop.f32.mrb[0].mxu0
    %382 = vdwg.mxu0
    %383 = vadd.xlane.f32.xlu0 %v377
    %v384 = vpop.xlane.xlu0 %383
    %385 = vadd.xlane.f32.xlu0 %v380
    %v386 = vpop.xlane.xlu0 %385
    %v387 = vmul.f32 %v384, 0.03125
    %v388 = vmul.f32 %v386, 0.03125
    %v389 = vsub.f32 %v377, %v387
    %v390 = vsub.f32 %v380, %v388
    %v391 = vsel %vm246, %v389, 0.0
    %v392 = vsel %vm246, %v390, 0.0
    %v393 = vmul.f32 %v391, %v391
    %v394 = vmul.f32 %v392, %v392
    %395 = vadd.xlane.f32.xlu0 %v393
    %v396 = vpop.xlane.xlu0 %395
    %397 = vadd.xlane.f32.xlu0 %v394
    %v398 = vpop.xlane.xlu0 %397
    %v399 = vmul.f32 %v396, 0.03125
    %v400 = vmul.f32 %v398, 0.03125
    %v401 = vadd.f32 %v399, 1e-05
    %v402 = vadd.f32 %v400, 1e-05
    %v403 = vrsqrt.pop %v401
    %v404 = vrsqrt.pop %v402
    %v405 = vmul.f32 %v389, %v403
    %v406 = vmul.f32 %v390, %v404
    %v407 = vlaneseq
    %v408 = vshrl.u32 %v407, 7
    %v409 = vsub.s32 0, %v408
    %v410 = vrot.slane %v84, %v409
    %v411 = vmul.f32 %v405, %v410
    %v412 = vmul.f32 %v406, %v410
    %v413 = vlaneseq
    %v414 = vshrl.u32 %v413, 7
    %v415 = vsub.s32 0, %v414
    %v416 = vrot.slane %v85, %v415
    %v417 = vadd.f32 %v411, %v416
    %v418 = vadd.f32 %v412, %v416
    %v419 = vxor.u32 %v417, 2147483648
    %v420 = vxor.u32 %v418, 2147483648
    %v421 = vmul.f32 %v419, 1.442695
    %v422 = vpow.pop %v421
    %v423 = vmul.f32 %v420, 1.442695
    %v424 = vpow.pop %v423
    %v425 = vadd.f32 %v422, 1.0
    %v426 = vadd.f32 %v424, 1.0
    %v427 = vrcp.pop %v425
    %v428 = vmul.f32 1.0, %v427
    %v429 = vrcp.pop %v426
    %v430 = vmul.f32 1.0, %v429
    %v431 = vmul.f32 %v417, %v428
    %v432 = vmul.f32 %v418, %v430
    %v433 = vpack.c.bf16 %v432, %v431
    %v435 = vlaneseq
    %v436 = vshrl.u32 %v435, 7
    %v437 = vsub.s32 0, %v436
    %v438 = vrot.slane %v134, %v437
    %v456 = vunpack.c.l.b16 %v118
    %v457 = vunpack.c.l.b16 %v119
    %v458 = vunpack.c.l.b16 %v120
    %v459 = vunpack.c.l.b16 %v121
    %v460 = vunpack.c.l.b16 %v122
    %v461 = vunpack.c.l.b16 %v123
    %v462 = vunpack.c.l.b16 %v124
    %v463 = vunpack.c.l.b16 %v125
    %v464 = vunpack.c.l.b16 %v126
    %v465 = vunpack.c.l.b16 %v127
    %v466 = vunpack.c.l.b16 %v128
    %v467 = vunpack.c.l.b16 %v129
    %v468 = vunpack.c.l.b16 %v130
    %v469 = vunpack.c.l.b16 %v131
    %v470 = vunpack.c.l.b16 %v132
    %v471 = vunpack.c.l.b16 %v133
    %v472 = vpack.c.b16 %v457, %v456
    %v473 = vpack.c.b16 %v459, %v458
    %v474 = vpack.c.b16 %v461, %v460
    %v475 = vpack.c.b16 %v463, %v462
    %v476 = vpack.c.b16 %v465, %v464
    %v477 = vpack.c.b16 %v467, %v466
    %v478 = vpack.c.b16 %v469, %v468
    %v479 = vpack.c.b16 %v471, %v470
    %488 = vmatprep.subr.bf16.mxu0 0
    %489 = vmatpush1.bf16.msra.mxu0 %v472
    %490 = vmatprep.subr.bf16.mxu0 0
    %491 = vmatpush1.bf16.msra.mxu0 %v473
    %492 = vmatprep.subr.bf16.mxu0 0
    %493 = vmatpush1.bf16.msra.mxu0 %v474
    %494 = vmatprep.subr.bf16.mxu0 0
    %495 = vmatpush1.bf16.msra.mxu0 %v475
    %496 = vmatprep.subr.bf16.mxu0 0
    %497 = vmatpush1.bf16.msra.mxu0 %v476
    %498 = vmatprep.subr.bf16.mxu0 0
    %499 = vmatpush1.bf16.msra.mxu0 %v477
    %500 = vmatprep.subr.bf16.mxu0 0
    %501 = vmatpush1.bf16.msra.mxu0 %v478
    %502 = vmatprep.subr.bf16.mxu0 0
    %503 = vmatpush1.bf16.msra.mxu0 %v479
    %504 = vmatprep.subr.bf16.mxu0 0
    %505 = vmatpush1.bf16.msra.mxu0 0
    %506 = vmatprep.subr.bf16.mxu0 0
    %507 = vmatpush1.bf16.msra.mxu0 0
    %508 = vmatprep.subr.bf16.mxu0 0
    %509 = vmatpush1.bf16.msra.mxu0 0
    %510 = vmatprep.subr.bf16.mxu0 0
    %511 = vmatpush1.bf16.msra.mxu0 0
    %512 = vmatprep.subr.bf16.mxu0 0
    %513 = vmatpush1.bf16.msra.mxu0 0
    %514 = vmatprep.subr.bf16.mxu0 0
    %515 = vmatpush1.bf16.msra.mxu0 0
    %516 = vmatprep.subr.bf16.mxu0 0
    %517 = vmatpush1.bf16.msra.mxu0 0
    %518 = vmatprep.subr.bf16.mxu0 0
    %519 = vmatpush1.bf16.msra.mxu0 0
    %520 = vmatprep.mubr.bf16.mxu0 0
    %521 = vmatmul.mubr.bf16.gmra.mrb[0].mxu0 %v433
    %v522 = vpop.f32.mrb[0].mxu0
    %v523 = vadd.f32 %v438, %v522
    %v524 = vpop.f32.mrb[0].mxu0
    %v525 = vpop.f32.mrb[0].mxu0
    %v526 = vadd.f32 %v438, %v525
    %v527 = vpop.f32.mrb[0].mxu0
    %528 = vdwg.mxu0
    %529 = vst [vmem:[#allocation10] sm:$0xff] %v523
    %530 = vst [vmem:[#allocation10 + $0x8] sm:$0xff] %v526
    %v531 = vld [vmem:[#allocation2 + $0x8] sm:$0xf]
    %v532 = vld [vmem:[#allocation2 + $0xc] sm:$0xf]
    %v535 = vunpack.c.l.b16 %v531
    %v536 = vunpack.c.l.b16 %v532
    %v537 = vpack.c.b16 %v536, %v535
    %539 = vmatprep.subr.bf16.mxu0 0
    %540 = vmatpush1.bf16.msra.mxu0 %v179
    %541 = vmatprep.subr.bf16.mxu0 0
    %542 = vmatpush1.bf16.msra.mxu0 %v180
    %543 = vmatprep.subr.bf16.mxu0 0
    %544 = vmatpush1.bf16.msra.mxu0 %v181
    %545 = vmatprep.subr.bf16.mxu0 0
    %546 = vmatpush1.bf16.msra.mxu0 %v182
    %547 = vmatprep.subr.bf16.mxu0 0
    %548 = vmatpush1.bf16.msra.mxu0 %v183
    %549 = vmatprep.subr.bf16.mxu0 0
    %550 = vmatpush1.bf16.msra.mxu0 %v184
    %551 = vmatprep.subr.bf16.mxu0 0
    %552 = vmatpush1.bf16.msra.mxu0 %v185
    %553 = vmatprep.subr.bf16.mxu0 0
    %554 = vmatpush1.bf16.msra.mxu0 %v186
    %555 = vmatprep.subr.bf16.mxu0 0
    %556 = vmatpush1.bf16.msra.mxu0 0
    %557 = vmatprep.subr.bf16.mxu0 0
    %558 = vmatpush1.bf16.msra.mxu0 0
    %559 = vmatprep.subr.bf16.mxu0 0
    %560 = vmatpush1.bf16.msra.mxu0 0
    %561 = vmatprep.subr.bf16.mxu0 0
    %562 = vmatpush1.bf16.msra.mxu0 0
    %563 = vmatprep.subr.bf16.mxu0 0
    %564 = vmatpush1.bf16.msra.mxu0 0
    %565 = vmatprep.subr.bf16.mxu0 0
    %566 = vmatpush1.bf16.msra.mxu0 0
    %567 = vmatprep.subr.bf16.mxu0 0
    %568 = vmatpush1.bf16.msra.mxu0 0
    %569 = vmatprep.subr.bf16.mxu0 0
    %570 = vmatpush1.bf16.msra.mxu0 0
    %571 = vmatprep.mubr.bf16.mxu0 0
    %572 = vmatmul.mubr.bf16.gmra.mrb[0].mxu0 %v537
    %v573 = vpop.f32.mrb[0].mxu0
    %v574 = vadd.f32 %v140, %v573
    %v575 = vpop.f32.mrb[0].mxu0
    %v576 = vpop.f32.mrb[0].mxu0
    %v577 = vadd.f32 %v140, %v576
    %v578 = vpop.f32.mrb[0].mxu0
    %579 = vdwg.mxu0
    %580 = vadd.xlane.f32.xlu0 %v574
    %v581 = vpop.xlane.xlu0 %580
    %582 = vadd.xlane.f32.xlu0 %v577
    %v583 = vpop.xlane.xlu0 %582
    %v584 = vmul.f32 %v581, 0.03125
    %v585 = vmul.f32 %v583, 0.03125
    %v586 = vsub.f32 %v574, %v584
    %v587 = vsub.f32 %v577, %v585
    %v588 = vsel %vm246, %v586, 0.0
    %v589 = vsel %vm246, %v587, 0.0
    %v590 = vmul.f32 %v588, %v588
    %v591 = vmul.f32 %v589, %v589
    %592 = vadd.xlane.f32.xlu0 %v590
    %v593 = vpop.xlane.xlu0 %592
    %594 = vadd.xlane.f32.xlu0 %v591
    %v595 = vpop.xlane.xlu0 %594
    %v596 = vmul.f32 %v593, 0.03125
    %v597 = vmul.f32 %v595, 0.03125
    %v598 = vadd.f32 %v596, 1e-05
    %v599 = vadd.f32 %v597, 1e-05
    %v600 = vrsqrt.pop %v598
    %v601 = vrsqrt.pop %v599
    %v602 = vmul.f32 %v586, %v600
    %v603 = vmul.f32 %v587, %v601
    %v604 = vmul.f32 %v602, %v266
    %v605 = vmul.f32 %v603, %v266
    %v606 = vadd.f32 %v604, %v272
    %v607 = vadd.f32 %v605, %v272
    %v608 = vxor.u32 %v606, 2147483648
    %v609 = vxor.u32 %v607, 2147483648
    %v610 = vmul.f32 %v608, 1.442695
    %v611 = vpow.pop %v610
    %v612 = vmul.f32 %v609, 1.442695
    %v613 = vpow.pop %v612
    %v614 = vadd.f32 %v611, 1.0
    %v615 = vadd.f32 %v613, 1.0
    %v616 = vrcp.pop %v614
    %v617 = vmul.f32 1.0, %v616
    %v618 = vrcp.pop %v615
    %v619 = vmul.f32 1.0, %v618
    %v620 = vmul.f32 %v606, %v617
    %v621 = vmul.f32 %v607, %v619
    %v622 = vpack.c.bf16 %v621, %v620
    %623 = vmatprep.subr.bf16.mxu0 0
    %624 = vmatpush1.bf16.msra.mxu0 %v326
    %625 = vmatprep.subr.bf16.mxu0 0
    %626 = vmatpush1.bf16.msra.mxu0 %v327
    %627 = vmatprep.subr.bf16.mxu0 0
    %628 = vmatpush1.bf16.msra.mxu0 %v328
    %629 = vmatprep.subr.bf16.mxu0 0
    %630 = vmatpush1.bf16.msra.mxu0 %v329
    %631 = vmatprep.subr.bf16.mxu0 0
    %632 = vmatpush1.bf16.msra.mxu0 %v330
    %633 = vmatprep.subr.bf16.mxu0 0
    %634 = vmatpush1.bf16.msra.mxu0 %v331
    %635 = vmatprep.subr.bf16.mxu0 0
    %636 = vmatpush1.bf16.msra.mxu0 %v332
    %637 = vmatprep.subr.bf16.mxu0 0
    %638 = vmatpush1.bf16.msra.mxu0 %v333
    %639 = vmatprep.subr.bf16.mxu0 0
    %640 = vmatpush1.bf16.msra.mxu0 0
    %641 = vmatprep.subr.bf16.mxu0 0
    %642 = vmatpush1.bf16.msra.mxu0 0
    %643 = vmatprep.subr.bf16.mxu0 0
    %644 = vmatpush1.bf16.msra.mxu0 0
    %645 = vmatprep.subr.bf16.mxu0 0
    %646 = vmatpush1.bf16.msra.mxu0 0
    %647 = vmatprep.subr.bf16.mxu0 0
    %648 = vmatpush1.bf16.msra.mxu0 0
    %649 = vmatprep.subr.bf16.mxu0 0
    %650 = vmatpush1.bf16.msra.mxu0 0
    %651 = vmatprep.subr.bf16.mxu0 0
    %652 = vmatpush1.bf16.msra.mxu0 0
    %653 = vmatprep.subr.bf16.mxu0 0
    %654 = vmatpush1.bf16.msra.mxu0 0
    %655 = vmatprep.mubr.bf16.mxu0 0
    %656 = vmatmul.mubr.bf16.gmra.mrb[0].mxu0 %v622
    %v657 = vpop.f32.mrb[0].mxu0
    %v658 = vadd.f32 %v293, %v657
    %v659 = vpop.f32.mrb[0].mxu0
    %v660 = vpop.f32.mrb[0].mxu0
    %v661 = vadd.f32 %v293, %v660
    %v662 = vpop.f32.mrb[0].mxu0
    %663 = vdwg.mxu0
    %664 = vadd.xlane.f32.xlu0 %v658
    %v665 = vpop.xlane.xlu0 %664
    %666 = vadd.xlane.f32.xlu0 %v661
    %v667 = vpop.xlane.xlu0 %666
    %v668 = vmul.f32 %v665, 0.03125
    %v669 = vmul.f32 %v667, 0.03125
    %v670 = vsub.f32 %v658, %v668
    %v671 = vsub.f32 %v661, %v669
    %v672 = vsel %vm246, %v670, 0.0
    %v673 = vsel %vm246, %v671, 0.0
    %v674 = vmul.f32 %v672, %v672
    %v675 = vmul.f32 %v673, %v673
    %676 = vadd.xlane.f32.xlu0 %v674
    %v677 = vpop.xlane.xlu0 %676
    %678 = vadd.xlane.f32.xlu0 %v675
    %v679 = vpop.xlane.xlu0 %678
    %v680 = vmul.f32 %v677, 0.03125
    %v681 = vmul.f32 %v679, 0.03125
    %v682 = vadd.f32 %v680, 1e-05
    %v683 = vadd.f32 %v681, 1e-05
    %v684 = vrsqrt.pop %v682
    %v685 = vrsqrt.pop %v683
    %v686 = vmul.f32 %v670, %v684
    %v687 = vmul.f32 %v671, %v685
    %v688 = vmul.f32 %v686, %v410
    %v689 = vmul.f32 %v687, %v410
    %v690 = vadd.f32 %v688, %v416
    %v691 = vadd.f32 %v689, %v416
    %v692 = vxor.u32 %v690, 2147483648
    %v693 = vxor.u32 %v691, 2147483648
    %v694 = vmul.f32 %v692, 1.442695
    %v695 = vpow.pop %v694
    %v696 = vmul.f32 %v693, 1.442695
    %v697 = vpow.pop %v696
    %v698 = vadd.f32 %v695, 1.0
    %v699 = vadd.f32 %v697, 1.0
    %v700 = vrcp.pop %v698
    %v701 = vmul.f32 1.0, %v700
    %v702 = vrcp.pop %v699
    %v703 = vmul.f32 1.0, %v702
    %v704 = vmul.f32 %v690, %v701
    %v705 = vmul.f32 %v691, %v703
    %v706 = vpack.c.bf16 %v705, %v704
    %707 = vmatprep.subr.bf16.mxu0 0
    %708 = vmatpush1.bf16.msra.mxu0 %v472
    %709 = vmatprep.subr.bf16.mxu0 0
    %710 = vmatpush1.bf16.msra.mxu0 %v473
    %711 = vmatprep.subr.bf16.mxu0 0
    %712 = vmatpush1.bf16.msra.mxu0 %v474
    %713 = vmatprep.subr.bf16.mxu0 0
    %714 = vmatpush1.bf16.msra.mxu0 %v475
    %715 = vmatprep.subr.bf16.mxu0 0
    %716 = vmatpush1.bf16.msra.mxu0 %v476
    %717 = vmatprep.subr.bf16.mxu0 0
    %718 = vmatpush1.bf16.msra.mxu0 %v477
    %719 = vmatprep.subr.bf16.mxu0 0
    %720 = vmatpush1.bf16.msra.mxu0 %v478
    %721 = vmatprep.subr.bf16.mxu0 0
    %722 = vmatpush1.bf16.msra.mxu0 %v479
    %723 = vmatprep.subr.bf16.mxu0 0
    %724 = vmatpush1.bf16.msra.mxu0 0
    %725 = vmatprep.subr.bf16.mxu0 0
    %726 = vmatpush1.bf16.msra.mxu0 0
    %727 = vmatprep.subr.bf16.mxu0 0
    %728 = vmatpush1.bf16.msra.mxu0 0
    %729 = vmatprep.subr.bf16.mxu0 0
    %730 = vmatpush1.bf16.msra.mxu0 0
    %731 = vmatprep.subr.bf16.mxu0 0
    %732 = vmatpush1.bf16.msra.mxu0 0
    %733 = vmatprep.subr.bf16.mxu0 0
    %734 = vmatpush1.bf16.msra.mxu0 0
    %735 = vmatprep.subr.bf16.mxu0 0
    %736 = vmatpush1.bf16.msra.mxu0 0
    %737 = vmatprep.subr.bf16.mxu0 0
    %738 = vmatpush1.bf16.msra.mxu0 0
    %739 = vmatprep.mubr.bf16.mxu0 0
    %740 = vmatmul.mubr.bf16.gmra.mrb[0].mxu0 %v706
    %v741 = vpop.f32.mrb[0].mxu0
    %v742 = vadd.f32 %v438, %v741
    %v743 = vpop.f32.mrb[0].mxu0
    %v744 = vpop.f32.mrb[0].mxu0
    %v745 = vadd.f32 %v438, %v744
    %v746 = vpop.f32.mrb[0].mxu0
    %747 = vdwg.mxu0
    %748 = vst [vmem:[#allocation10 + $0x10] sm:$0xff] %v742
    %749 = vst [vmem:[#allocation10 + $0x18] sm:$0xff] %v745
    // Predicated region
    $region42: #{tpu_custom_call.1} parent=1 // pred_check
      _
    $region43: #{tpu_custom_call.1} parent=1 // pred_check_branch
      %751 = sbr.rel (0) target = $region45
    $region44: #{tpu_custom_call.1} parent=1 // pred_region
      %s753 = ssub.s32 512, 512
      %754 = vsyncadd [#allocation4], %s753
      %s755 = sshll.u32 [#allocation10], 4
      %s756 = int_to_ptr.vmem [resolvable:$true] %s755
      %761 = dma.vmem_to_hbm [thread:$0]  %s756, 512, %s6, [#allocation4], 128, 128, 8
    $region45: #{tpu_custom_call.1} parent=1 // pred_fallthru
      _
    // Predicated region
    $region46: #{tpu_custom_call.1} parent=1 // pred_check
      _
    $region47: #{tpu_custom_call.1} parent=1 // pred_check_branch
      %763 = sbr.rel (0) target = $region49
    $region48: #{tpu_custom_call.1} parent=1 // pred_region
      %764 = dma.done [#allocation4], 512
    $region49: #{tpu_custom_call.1} parent=1 // pred_fallthru
      _
    %765 = vsyncpa [#allocation3], 1
    %766 = vsyncpa [#allocation6], 1
    %767 = vsyncpa [#allocation9], 1
    %768 = vsyncpa [#allocation4], 1

</llo_original>
